<compile_context>
chip_gen: v7x
topology: tpu7x:2x2x1
jax: 0.10.0
libtpu: 0.0.40
codegen_flags: <defaults>
</compile_context>

<pallas_src>
import functools
import math

import jax
import jax.numpy as jnp
from jax.experimental import pallas as pl
from jax.experimental.pallas import tpu as pltpu

_LANE = 128


def _focal_loss_kernel(x_ref, y_ref, a_ref, cls_ref, sum_ref, cnt_ref,
                       acc_sum, acc_cnt, *, gamma, ignore_index):
    si = pl.program_id(1)

    @pl.when(si == 0)
    def _():
        acc_sum[...] = jnp.zeros_like(acc_sum)
        acc_cnt[...] = jnp.zeros_like(acc_cnt)

    x = x_ref[0].astype(jnp.float32)            # (C, TH, 128) logits
    y = y_ref[0]                                # (TH, 128) int32 labels

    # Numerically stable log-softmax over the class axis.  The class axis is a
    # vreg-count axis here, so these reductions are pure VALU max/adds.
    m = jnp.max(x, axis=0, keepdims=True)                        # (1, TH, 128)
    z = x - m
    lse = jnp.log(jnp.sum(jnp.exp(z), axis=0, keepdims=True))    # (1, TH, 128)

    valid = y != ignore_index                                    # (TH, 128)
    y_safe = jnp.where(valid, y, 0)

    # One-hot select of the target class (no dynamic gather on TPU).
    onehot = cls_ref[...] == y_safe[None]                        # (C, TH, 128)
    z_t = jnp.sum(jnp.where(onehot, z, 0.0), axis=0)             # (TH, 128)
    log_pt = z_t - lse[0]                                        # (TH, 128)
    a_y = jnp.sum(jnp.where(onehot, a_ref[...].astype(jnp.float32), 0.0),
                  axis=0)                                        # alpha[y]

    ce = -a_y * log_pt              # == NLLLoss(weight=alpha, reduction='none')
    pt = jnp.exp(log_pt)
    one_m_pt = jnp.maximum(1.0 - pt, 0.0)   # clamp fp noise so pow() is safe

    if gamma == 0.0:
        loss = ce
    elif gamma == int(gamma) and 0 < int(gamma) <= 4:
        # Integer gamma fast path (e.g. gamma=2): VALU multiplies instead of the
        # pow() -> exp/log pair on the single EUP slot.
        focal = one_m_pt
        for _ in range(int(gamma) - 1):
            focal = focal * one_m_pt
        loss = focal * ce
    else:
        loss = (one_m_pt ** gamma) * ce

    zero = jnp.float32(0.0)
    acc_sum[...] += jnp.where(valid, loss, zero)
    acc_cnt[...] += jnp.where(valid, 1.0, zero)

    @pl.when(si == pl.num_programs(1) - 1)
    def _():
        # Per-batch partial sums: one small cross-sublane reduce per batch row;
        # the final scalar reduction happens in plain JAX.
        sum_ref[...] = jnp.sum(acc_sum[...], axis=0, keepdims=True)[None]
        cnt_ref[...] = jnp.sum(acc_cnt[...], axis=0, keepdims=True)[None]


def focal_loss(x, y, alpha=None, gamma=0.0, reduction='mean', ignore_index=-100):
    """Focal loss forward.  x: (B, C) or (B, C, d1, ..., dK); y: matching labels."""
    if reduction not in ('mean', 'sum'):
        # TODO(synk): reduction='none' returns the loss only over the
        # (dynamically many) unignored rows, which has no static-shape output.
        raise ValueError("Only 'mean' and 'sum' reductions are implemented.")

    c = x.shape[1]
    if x.ndim > 2:
        # Flattening the trailing spatial dims of NC... is a free contiguous
        # reshape -- no HBM transpose like the torch permute.
        b = x.shape[0]
        s = math.prod(x.shape[2:])
        x3 = x.reshape(b, c, s)
        y2 = y.reshape(b, s)
    else:
        # (N, C): one small transpose so the class axis is non-minor.
        b, s = 1, x.shape[0]
        x3 = x.T.reshape(1, c, s)
        y2 = y.reshape(1, s)
    y2 = y2.astype(jnp.int32)

    # Fold spatial onto (sublane rows, 128 lanes) and pick a VMEM-budgeted row
    # tile: ~4 MiB of f32 working set per (C, TH, 128) tile.
    sh_raw = -(-s // _LANE)
    th_budget = (4 * 1024 * 1024) // (c * _LANE * 4)
    th_budget = max(8, min(4096, (th_budget // 8) * 8))
    if sh_raw <= th_budget:
        th, sh = sh_raw, sh_raw
    else:
        th = th_budget
        sh = -(-sh_raw // th) * th
    s_pad = sh * _LANE
    if s_pad != s:
        # Padded positions carry ignore_index: they contribute to neither the
        # loss sum nor the valid count.
        x3 = jnp.pad(x3, ((0, 0), (0, 0), (0, s_pad - s)))
        y2 = jnp.pad(y2, ((0, 0), (0, s_pad - s)), constant_values=ignore_index)
    x4 = x3.reshape(b, c, sh, _LANE)        # native dtype; cast to f32 in-kernel
    y3 = y2.reshape(b, sh, _LANE)

    if alpha is None:
        alpha = jnp.ones((c,), jnp.float32)
    alpha_b = jnp.broadcast_to(
        jnp.asarray(alpha, jnp.float32).reshape(c, 1, 1), (c, 1, _LANE))
    cls_b = jnp.broadcast_to(
        jnp.arange(c, dtype=jnp.int32).reshape(c, 1, 1), (c, 1, _LANE))

    num_s = sh // th
    # TODO(synk): for many small images (large B, tiny S) also block over the
    # batch axis so each grid step still moves a few MiB.
    kernel = functools.partial(_focal_loss_kernel,
                               gamma=float(gamma),
                               ignore_index=int(ignore_index))

    cost = pl.CostEstimate(
        flops=int(12 * b * s_pad * c),
        transcendentals=int(b * s_pad * (c + 2)),
        bytes_accessed=int(x4.size * x4.dtype.itemsize + y3.size * 4
                           + (alpha_b.size + cls_b.size) * 4 + 2 * b * _LANE * 4))

    out_sum, out_cnt = pl.pallas_call(
        kernel,
        out_shape=(jax.ShapeDtypeStruct((b, 1, _LANE), jnp.float32),
                   jax.ShapeDtypeStruct((b, 1, _LANE), jnp.float32)),
        grid_spec=pltpu.PrefetchScalarGridSpec(
            num_scalar_prefetch=0,
            grid=(b, num_s),
            in_specs=[
                pl.BlockSpec((1, c, th, _LANE), lambda bi, si: (bi, 0, si, 0)),
                pl.BlockSpec((1, th, _LANE), lambda bi, si: (bi, si, 0)),
                pl.BlockSpec((c, 1, _LANE), lambda bi, si: (0, 0, 0)),  # alpha
                pl.BlockSpec((c, 1, _LANE), lambda bi, si: (0, 0, 0)),  # class ids
            ],
            out_specs=[
                pl.BlockSpec((1, 1, _LANE), lambda bi, si: (bi, 0, 0)),
                pl.BlockSpec((1, 1, _LANE), lambda bi, si: (bi, 0, 0)),
            ],
            scratch_shapes=[
                pltpu.VMEM((th, _LANE), jnp.float32),   # per-position loss sums
                pltpu.VMEM((th, _LANE), jnp.float32),   # per-position valid counts
            ],
        ),
        compiler_params=pltpu.CompilerParams(
            # Batch axis can be split across TensorCores (v7x megacore); the
            # spatial axis is the sequential reduction.
            dimension_semantics=("parallel", "arbitrary"),
            vmem_limit_bytes=48 * 1024 * 1024),
        cost_estimate=cost,
    )(x4, y3, alpha_b, cls_b)

    total = jnp.sum(out_sum)
    count = jnp.sum(out_cnt)
    if reduction == 'sum':
        return jnp.where(count > 0, total, jnp.float32(0.0))
    return jnp.where(count > 0, total / count, jnp.float32(0.0))   # 'mean'


def _focal_loss_ref(x, y, alpha, gamma, ignore_index, reduction='mean'):
    """Pure-JAX reference mirroring the PyTorch module."""
    c = x.shape[1]
    if x.ndim > 2:
        perm = (0,) + tuple(range(2, x.ndim)) + (1,)
        x = jnp.transpose(x, perm).reshape(-1, c)
        y = y.reshape(-1)
    valid = y != ignore_index
    y_safe = jnp.where(valid, y, 0)
    log_p = jax.nn.log_softmax(x.astype(jnp.float32), axis=-1)
    log_pt = jnp.take_along_axis(log_p, y_safe[:, None], axis=-1)[:, 0]
    a_y = alpha[y_safe]
    ce = -a_y * log_pt
    pt = jnp.exp(log_pt)
    loss = jnp.maximum(1.0 - pt, 0.0) ** gamma * ce
    loss = jnp.where(valid, loss, 0.0)
    k = jnp.sum(valid.astype(jnp.float32))
    s = jnp.sum(loss)
    if reduction == 'sum':
        return jnp.where(k > 0, s, 0.0)
    return jnp.where(k > 0, s / k, 0.0)


if __name__ == "__main__":
    key = jax.random.PRNGKey(0)
    kx, ky, ka, kx2, ky2 = jax.random.split(key, 5)

    B, C, H, W = 2, 4, 16, 16
    GAMMA = 2.0
    IGNORE = -100

    x = jax.random.normal(kx, (B, C, H, W), dtype=jnp.float32)
    y = jax.random.randint(ky, (B, H, W), 0, C, dtype=jnp.int32)
    # Sprinkle some ignored labels to exercise the mask path.
    y = y.at[0, 0, :4].set(IGNORE)
    alpha = jax.random.uniform(ka, (C,), dtype=jnp.float32, minval=0.25, maxval=1.0)

    out_mean = jax.block_until_ready(
        focal_loss(x, y, alpha=alpha, gamma=GAMMA,
                   reduction='mean', ignore_index=IGNORE))
    ref_mean = _focal_loss_ref(x, y, alpha, GAMMA, IGNORE, reduction='mean')
    assert jnp.allclose(out_mean, ref_mean, rtol=1e-5, atol=1e-6), (out_mean, ref_mean)

    out_sum = jax.block_until_ready(
        focal_loss(x, y, alpha=alpha, gamma=GAMMA,
                   reduction='sum', ignore_index=IGNORE))
    ref_sum = _focal_loss_ref(x, y, alpha, GAMMA, IGNORE, reduction='sum')
    assert jnp.allclose(out_sum, ref_sum, rtol=1e-5, atol=1e-4), (out_sum, ref_sum)

    # 2-D (batch, C) path, default alpha, fractional gamma (generic pow branch).
    x2 = jax.random.normal(kx2, (8, C), dtype=jnp.float32)
    y2 = jax.random.randint(ky2, (8,), 0, C, dtype=jnp.int32)
    y2 = y2.at[3].set(IGNORE)
    out2 = jax.block_until_ready(
        focal_loss(x2, y2, alpha=None, gamma=0.5,
                   reduction='mean', ignore_index=IGNORE))
    ref2 = _focal_loss_ref(x2, y2, jnp.ones((C,), jnp.float32), 0.5, IGNORE, 'mean')
    assert jnp.allclose(out2, ref2, rtol=1e-5, atol=1e-6), (out2, ref2)

    print("KERNEL_OK")
</pallas_src>

<mosaic_0001>
module attributes {stable_mosaic.version = 11 : i64} {
  func.func @_focal_loss_kernel(%arg0: i32, %arg1: i32, %arg2: memref<1x4x2x128xf32, #tpu.memory_space<vmem>>, %arg3: memref<1x2x128xi32, #tpu.memory_space<vmem>>, %arg4: memref<4x1x128xf32, #tpu.memory_space<vmem>>, %arg5: memref<4x1x128xi32, #tpu.memory_space<vmem>>, %arg6: memref<1x1x128xf32, #tpu.memory_space<vmem>>, %arg7: memref<1x1x128xf32, #tpu.memory_space<vmem>>, %arg8: memref<2x128xf32, #tpu.memory_space<vmem>>, %arg9: memref<2x128xf32, #tpu.memory_space<vmem>>) attributes {dimension_semantics = [#tpu.dimension_semantics<parallel>, #tpu.dimension_semantics<arbitrary>], iteration_bounds = array<i64: 2, 1>, scalar_prefetch = 0 : i64, scratch_operands = 2 : i64, tpu.core_type = #tpu.core_type<tc>, window_params = [{transform_indices = @transform_0, window_bounds = array<i64: 1, 4, 2, 128>}, {transform_indices = @transform_1, window_bounds = array<i64: 1, 2, 128>}, {pipeline_mode = #tpu.pipeline_mode<synchronous>, transform_indices = @transform_2, window_bounds = array<i64: 4, 1, 128>}, {pipeline_mode = #tpu.pipeline_mode<synchronous>, transform_indices = @transform_3, window_bounds = array<i64: 4, 1, 128>}, {transform_indices = @transform_4, window_bounds = array<i64: 1, 1, 128>}, {transform_indices = @transform_5, window_bounds = array<i64: 1, 1, 128>}]} {
    %c0_i32 = arith.constant 0 : i32
    %0 = arith.cmpi eq, %arg1, %c0_i32 : i32
    %1 = arith.extui %0 : i1 to i32
    %c0_i32_0 = arith.constant 0 : i32
    %2 = arith.cmpi ne, %1, %c0_i32_0 : i32
    scf.if %2 {
      %cst_35 = arith.constant 0.000000e+00 : f32
      %59 = vector.broadcast %cst_35 : f32 to vector<2x128xf32>
      %c0_36 = arith.constant 0 : index
      %c0_37 = arith.constant 0 : index
      %60 = vector.load %arg8[%c0_36, %c0_37] : memref<2x128xf32, #tpu.memory_space<vmem>>, vector<2x128xf32>
      tpu.vector_store %arg8[%c0_36, %c0_37], %59 {strides = array<i32>} : memref<2x128xf32, #tpu.memory_space<vmem>>, vector<2x128xf32>,
      %cst_38 = arith.constant 0.000000e+00 : f32
      %61 = vector.broadcast %cst_38 : f32 to vector<2x128xf32>
      %c0_39 = arith.constant 0 : index
      %c0_40 = arith.constant 0 : index
      %62 = vector.load %arg9[%c0_39, %c0_40] : memref<2x128xf32, #tpu.memory_space<vmem>>, vector<2x128xf32>
      tpu.vector_store %arg9[%c0_39, %c0_40], %61 {strides = array<i32>} : memref<2x128xf32, #tpu.memory_space<vmem>>, vector<2x128xf32>,
    } else {
    }
    %c0 = arith.constant 0 : index
    %c0_1 = arith.constant 0 : index
    %c0_2 = arith.constant 0 : index
    %c0_3 = arith.constant 0 : index
    %3 = vector.load %arg2[%c0, %c0_1, %c0_2, %c0_3] : memref<1x4x2x128xf32, #tpu.memory_space<vmem>>, vector<1x4x2x128xf32>
    %4 = vector.shape_cast %3 : vector<1x4x2x128xf32> to vector<4x2x128xf32>
    %c0_4 = arith.constant 0 : index
    %c0_5 = arith.constant 0 : index
    %c0_6 = arith.constant 0 : index
    %5 = vector.load %arg3[%c0_4, %c0_5, %c0_6] : memref<1x2x128xi32, #tpu.memory_space<vmem>>, vector<1x2x128xi32>
    %6 = vector.shape_cast %5 : vector<1x2x128xi32> to vector<2x128xi32>
    %cst = arith.constant dense<0xFF800000> : vector<2x128xf32>
    %7 = vector.multi_reduction <maximumf>, %4, %cst [0] : vector<4x2x128xf32> to vector<2x128xf32>
    %8 = vector.shape_cast %7 : vector<2x128xf32> to vector<1x2x128xf32>
    %9 = vector.broadcast %8 : vector<1x2x128xf32> to vector<4x2x128xf32>
    %10 = arith.subf %4, %9 : vector<4x2x128xf32>
    %11 = math.exp %10 : vector<4x2x128xf32>
    %cst_7 = arith.constant dense<0.000000e+00> : vector<2x128xf32>
    %12 = vector.multi_reduction <add>, %11, %cst_7 [0] : vector<4x2x128xf32> to vector<2x128xf32>
    %13 = vector.shape_cast %12 : vector<2x128xf32> to vector<1x2x128xf32>
    %14 = math.log %13 : vector<1x2x128xf32>
    %c-100_i32 = arith.constant -100 : i32
    %15 = vector.broadcast %c-100_i32 : i32 to vector<2x128xi32>
    %16 = arith.cmpi ne, %6, %15 : vector<2x128xi32>
    %c0_i32_8 = arith.constant 0 : i32
    %17 = vector.broadcast %c0_i32_8 : i32 to vector<2x128xi32>
    %18 = arith.select %16, %6, %17 : vector<2x128xi1>, vector<2x128xi32>
    %c0_9 = arith.constant 0 : index
    %c0_10 = arith.constant 0 : index
    %c0_11 = arith.constant 0 : index
    %19 = vector.load %arg5[%c0_9, %c0_10, %c0_11] : memref<4x1x128xi32, #tpu.memory_space<vmem>>, vector<4x1x128xi32>
    %20 = vector.shape_cast %18 : vector<2x128xi32> to vector<1x2x128xi32>
    %21 = vector.broadcast %19 : vector<4x1x128xi32> to vector<4x2x128xi32>
    %22 = vector.broadcast %20 : vector<1x2x128xi32> to vector<4x2x128xi32>
    %23 = arith.cmpi eq, %21, %22 : vector<4x2x128xi32>
    %cst_12 = arith.constant 0.000000e+00 : f32
    %24 = vector.broadcast %cst_12 : f32 to vector<4x2x128xf32>
    %25 = arith.select %23, %10, %24 : vector<4x2x128xi1>, vector<4x2x128xf32>
    %cst_13 = arith.constant dense<0.000000e+00> : vector<2x128xf32>
    %26 = vector.multi_reduction <add>, %25, %cst_13 [0] : vector<4x2x128xf32> to vector<2x128xf32>
    %27 = vector.shape_cast %14 : vector<1x2x128xf32> to vector<2x128xf32>
    %28 = arith.subf %26, %27 : vector<2x128xf32>
    %c0_14 = arith.constant 0 : index
    %c0_15 = arith.constant 0 : index
    %c0_16 = arith.constant 0 : index
    %29 = vector.load %arg4[%c0_14, %c0_15, %c0_16] : memref<4x1x128xf32, #tpu.memory_space<vmem>>, vector<4x1x128xf32>
    %cst_17 = arith.constant 0.000000e+00 : f32
    %30 = vector.shape_cast %29 : vector<4x1x128xf32> to vector<4x1x128xf32>
    %31 = vector.broadcast %30 : vector<4x1x128xf32> to vector<4x2x128xf32>
    %32 = vector.broadcast %cst_17 : f32 to vector<4x2x128xf32>
    %33 = arith.select %23, %31, %32 : vector<4x2x128xi1>, vector<4x2x128xf32>
    %cst_18 = arith.constant dense<0.000000e+00> : vector<2x128xf32>
    %34 = vector.multi_reduction <add>, %33, %cst_18 [0] : vector<4x2x128xf32> to vector<2x128xf32>
    %cst_19 = arith.constant 0.000000e+00 : f32
    %35 = vector.broadcast %cst_19 : f32 to vector<2x128xf32>
    %36 = arith.subf %35, %34 : vector<2x128xf32>
    %37 = arith.mulf %36, %28 : vector<2x128xf32>
    %38 = math.exp %28 : vector<2x128xf32>
    %cst_20 = arith.constant 1.000000e+00 : f32
    %39 = vector.broadcast %cst_20 : f32 to vector<2x128xf32>
    %40 = arith.subf %39, %38 : vector<2x128xf32>
    %cst_21 = arith.constant 0.000000e+00 : f32
    %41 = vector.broadcast %cst_21 : f32 to vector<2x128xf32>
    %42 = arith.maximumf %40, %41 : vector<2x128xf32>
    %43 = arith.mulf %42, %42 : vector<2x128xf32>
    %44 = arith.mulf %43, %37 : vector<2x128xf32>
    %c0_22 = arith.constant 0 : index
    %c0_23 = arith.constant 0 : index
    %45 = vector.load %arg8[%c0_22, %c0_23] : memref<2x128xf32, #tpu.memory_space<vmem>>, vector<2x128xf32>
    %cst_24 = arith.constant 0.000000e+00 : f32
    %46 = vector.broadcast %cst_24 : f32 to vector<2x128xf32>
    %47 = arith.select %16, %44, %46 : vector<2x128xi1>, vector<2x128xf32>
    %48 = arith.addf %45, %47 : vector<2x128xf32>
    %c0_25 = arith.constant 0 : index
    %c0_26 = arith.constant 0 : index
    %49 = vector.load %arg8[%c0_25, %c0_26] : memref<2x128xf32, #tpu.memory_space<vmem>>, vector<2x128xf32>
    tpu.vector_store %arg8[%c0_25, %c0_26], %48 {strides = array<i32>} : memref<2x128xf32, #tpu.memory_space<vmem>>, vector<2x128xf32>,
    %c0_27 = arith.constant 0 : index
    %c0_28 = arith.constant 0 : index
    %50 = vector.load %arg9[%c0_27, %c0_28] : memref<2x128xf32, #tpu.memory_space<vmem>>, vector<2x128xf32>
    %cst_29 = arith.constant 1.000000e+00 : f32
    %cst_30 = arith.constant 0.000000e+00 : f32
    %51 = vector.broadcast %cst_29 : f32 to vector<2x128xf32>
    %52 = vector.broadcast %cst_30 : f32 to vector<2x128xf32>
    %53 = arith.select %16, %51, %52 : vector<2x128xi1>, vector<2x128xf32>
    %54 = arith.addf %50, %53 : vector<2x128xf32>
    %c0_31 = arith.constant 0 : index
    %c0_32 = arith.constant 0 : index
    %55 = vector.load %arg9[%c0_31, %c0_32] : memref<2x128xf32, #tpu.memory_space<vmem>>, vector<2x128xf32>
    tpu.vector_store %arg9[%c0_31, %c0_32], %54 {strides = array<i32>} : memref<2x128xf32, #tpu.memory_space<vmem>>, vector<2x128xf32>,
    %c0_i32_33 = arith.constant 0 : i32
    %56 = arith.cmpi eq, %arg1, %c0_i32_33 : i32
    %57 = arith.extui %56 : i1 to i32
    %c0_i32_34 = arith.constant 0 : i32
    %58 = arith.cmpi ne, %57, %c0_i32_34 : i32
    scf.if %58 {
      %c0_35 = arith.constant 0 : index
      %c0_36 = arith.constant 0 : index
      %59 = vector.load %arg8[%c0_35, %c0_36] : memref<2x128xf32, #tpu.memory_space<vmem>>, vector<2x128xf32>
      %cst_37 = arith.constant dense<0.000000e+00> : vector<128xf32>
      %60 = vector.multi_reduction <add>, %59, %cst_37 [0] : vector<2x128xf32> to vector<128xf32>
      %61 = vector.shape_cast %60 : vector<128xf32> to vector<1x128xf32>
      %62 = vector.shape_cast %61 : vector<1x128xf32> to vector<1x1x128xf32>
      %c0_38 = arith.constant 0 : index
      %c0_39 = arith.constant 0 : index
      %c0_40 = arith.constant 0 : index
      %63 = vector.load %arg6[%c0_38, %c0_39, %c0_40] : memref<1x1x128xf32, #tpu.memory_space<vmem>>, vector<1x1x128xf32>
      tpu.vector_store %arg6[%c0_38, %c0_39, %c0_40], %62 {strides = array<i32>} : memref<1x1x128xf32, #tpu.memory_space<vmem>>, vector<1x1x128xf32>,
      %c0_41 = arith.constant 0 : index
      %c0_42 = arith.constant 0 : index
      %64 = vector.load %arg9[%c0_41, %c0_42] : memref<2x128xf32, #tpu.memory_space<vmem>>, vector<2x128xf32>
      %cst_43 = arith.constant dense<0.000000e+00> : vector<128xf32>
      %65 = vector.multi_reduction <add>, %64, %cst_43 [0] : vector<2x128xf32> to vector<128xf32>
      %66 = vector.shape_cast %65 : vector<128xf32> to vector<1x128xf32>
      %67 = vector.shape_cast %66 : vector<1x128xf32> to vector<1x1x128xf32>
      %c0_44 = arith.constant 0 : index
      %c0_45 = arith.constant 0 : index
      %c0_46 = arith.constant 0 : index
      %68 = vector.load %arg7[%c0_44, %c0_45, %c0_46] : memref<1x1x128xf32, #tpu.memory_space<vmem>>, vector<1x1x128xf32>
      tpu.vector_store %arg7[%c0_44, %c0_45, %c0_46], %67 {strides = array<i32>} : memref<1x1x128xf32, #tpu.memory_space<vmem>>, vector<1x1x128xf32>,
    } else {
    }
    return
  }
  func.func @transform_0(%arg0: i32, %arg1: i32) -> (i32, i32, i32, i32) {
    %c0_i32 = arith.constant 0 : i32
    %c0_i32_0 = arith.constant 0 : i32
    %c0_i32_1 = arith.constant 0 : i32
    return %arg0, %c0_i32, %arg1, %c0_i32_0 : i32, i32, i32, i32
  }
  func.func @transform_1(%arg0: i32, %arg1: i32) -> (i32, i32, i32) {
    %c0_i32 = arith.constant 0 : i32
    %c0_i32_0 = arith.constant 0 : i32
    return %arg0, %arg1, %c0_i32 : i32, i32, i32
  }
  func.func @transform_2(%arg0: i32, %arg1: i32) -> (i32, i32, i32) {
    %c0_i32 = arith.constant 0 : i32
    %c0_i32_0 = arith.constant 0 : i32
    %c0_i32_1 = arith.constant 0 : i32
    %c0_i32_2 = arith.constant 0 : i32
    return %c0_i32, %c0_i32_0, %c0_i32_1 : i32, i32, i32
  }
  func.func @transform_3(%arg0: i32, %arg1: i32) -> (i32, i32, i32) {
    %c0_i32 = arith.constant 0 : i32
    %c0_i32_0 = arith.constant 0 : i32
    %c0_i32_1 = arith.constant 0 : i32
    %c0_i32_2 = arith.constant 0 : i32
    return %c0_i32, %c0_i32_0, %c0_i32_1 : i32, i32, i32
  }
  func.func @transform_4(%arg0: i32, %arg1: i32) -> (i32, i32, i32) {
    %c0_i32 = arith.constant 0 : i32
    %c0_i32_0 = arith.constant 0 : i32
    %c0_i32_1 = arith.constant 0 : i32
    return %arg0, %c0_i32, %c0_i32_0 : i32, i32, i32
  }
  func.func @transform_5(%arg0: i32, %arg1: i32) -> (i32, i32, i32) {
    %c0_i32 = arith.constant 0 : i32
    %c0_i32_0 = arith.constant 0 : i32
    %c0_i32_1 = arith.constant 0 : i32
    return %arg0, %c0_i32, %c0_i32_0 : i32, i32, i32
  }
}

</mosaic_0001>

<llo_original>
// kernel: tpu_custom_call.1
$region0: #{tpu_custom_call.1}
  #allocation0 [shape = 'u32[]', space=smem, size = 0x4, offset = 0x4, fixed_abs, tag = 'smem constant byte address 0x4 - core index']
  #allocation1 [shape = 'u32[144,128]{1,0:T(1,128)}', space=vmem, size = 0x12000, scoped, tag = 'internal scratch']
  #allocation2 [shape = 'f32[2,128]{1,0:T(2,128)}', space=vmem, size = 0x400, scoped, tag = 'scratch operand']
  #allocation3 [shape = 'f32[2,128]{1,0:T(2,128)}', space=vmem, size = 0x400, scoped, tag = 'scratch operand']
  %s0 = inlined_call_operand.hbm [shape: f32[2,4,2,128], index: 0, kind: input, shape index: {}]
  %s1 = inlined_call_operand.hbm [shape: s32[2,2,128], index: 1, kind: input, shape index: {}]
  %s2 = inlined_call_operand.vmem [shape: f32[4,1,128], index: 2, kind: input, shape index: {}]
  %s3 = inlined_call_operand.vmem [shape: s32[4,1,128], index: 3, kind: input, shape index: {}]
  %s4 = inlined_call_operand.hbm [shape: f32[2,1,128], index: 4, kind: output, shape index: {0}]
  %s5 = inlined_call_operand.hbm [shape: f32[2,1,128], index: 5, kind: output, shape index: {1}]
  %6 = xla_tuple %s4, %s5
  %s7 = sld [smem:[#allocation0]]
  $region73: #{tpu_custom_call.1} parent=0
    _
  %s9 = ssub.s32 1, %s7
  %s10 = scalar_select 0, %s9, %s7
  $region1: #{tpu_custom_call.1} parent=0
    #allocation4 [shape = 'u8[8192]{0}', space=vmem, size = 0x2000, scoped, tag = 'input window, operand 0']
    #allocation5 [shape = 's32[2]{0}', space=sflag, size = 0x8, scoped, tag = 'scoped memory for tpu_custom_call.1']
    #allocation6 [shape = 's32[2]{0}', space=sflag, size = 0x8, scoped, tag = 'scoped memory for tpu_custom_call.1']
    #allocation7 [shape = 'u8[2048]{0}', space=vmem, size = 0x800, scoped, tag = 'input window, operand 1']
    #allocation8 [shape = 's32[2]{0}', space=sflag, size = 0x8, scoped, tag = 'scoped memory for tpu_custom_call.1']
    #allocation9 [shape = 'u8[1024]{0}', space=vmem, size = 0x400, scoped, tag = 'output window, operand 0']
    #allocation10 [shape = 'u8[1024]{0}', space=vmem, size = 0x400, scoped, tag = 'output window, operand 1']
    #allocation11 [shape = 's32[2]{0}', space=sflag, size = 0x8, scoped, tag = 'scoped memory for tpu_custom_call.1']
    %11 = vsyncpa [#allocation5], 0
    %s12 = scalar_lea.sflag [#allocation5], 1
    %13 = vsyncpa %s12, 0
    %14 = vsyncpa [#allocation8], 0
    %s15 = scalar_lea.sflag [#allocation8], 1
    %16 = vsyncpa %s15, 0
    %17 = vsyncpa [#allocation6], 0
    %s18 = scalar_lea.sflag [#allocation6], 1
    %19 = vsyncpa %s18, 0
    %20 = vsyncpa [#allocation11], 0
    %s21 = scalar_lea.sflag [#allocation11], 1
    %22 = vsyncpa %s21, 0
    loop: start=0, step=1, limit=4
    $region2: #{tpu_custom_call.1} parent=1 // loop_pre_header
      _
    $region3: #{tpu_custom_call.1} parent=1 // loop_header
      %s24 = sphi 0, %s28
      %p25 = scmp.ge.s32.totalorder %s24, 4
      %s31 = sphi 0, %s43
      %s32 = sphi 0, %s39
      %s33 = sphi 0, %s31
      %s34 = sphi 0, %s32
      %s35 = sphi 0, %s33
      %s36 = sphi 0, %s34
      %s48 = sphi 0, %s50
      %s51 = sphi 0, %s48
      %s52 = sphi 0, %s51
      %s68 = sphi 0, %s52
      %s76 = sphi 0, %s78
      %s79 = sphi 0, %s76
      %s80 = sphi 0, %s79
      %s96 = sphi 0, %s80
      %s100 = sphi 0, %s100
      %s102 = sphi 0, %s100
      %s103 = sphi 0, %s102
      %s117 = sphi 0, %s103
      %s121 = sphi 0, %s121
      %s123 = sphi 0, %s121
      %s124 = sphi 0, %s123
      %s138 = sphi 0, %s124
      %s144 = sphi 0, %s146
      %s147 = sphi 0, %s144
      %s148 = sphi 0, %s147
      %s164 = sphi 0, %s148
      %s170 = sphi 0, %s172
      %s173 = sphi 0, %s170
      %s174 = sphi 0, %s173
      %s190 = sphi 0, %s174
    $region4: #{tpu_custom_call.1} parent=1 // loop_header_branch
      %27 = sbr.rel (%p25) target = $region8
    $region5: #{tpu_custom_call.1} parent=1 // loop_body
      %s29 = ssub.s32 %s24, 1
      %s30 = ssub.s32 %s24, 2
      %s37 = sadd.s32 1, %s32
      %p38 = scmp.ge.s32.totalorder %s37, 1
      %s39 = scalar_select %p38, 0, %s37
      %s40 = sadd.s32 1, %s31
      %s41 = scalar_select %p38, %s40, %s31
      %p42 = scmp.ge.s32.totalorder %s41, 2
      %s43 = scalar_select %p42, 0, %s41
      %s44 = ssub.s32 %s31, %s43
      %s45 = ssub.s32 %s32, %s39
      %s46 = sor.u32 %s44, %s45
      %p47 = scmp.eq.s32.totalorder %s46, 0
      %s49 = sadd.s32 %s48, 1
      %s50 = scalar_select %p47, %s48, %s49
      %p53 = pneg %p47
      %p54 = scmp.eq.s32.totalorder %s24, 1
      %p55 = por %p53, %p54
      %p56 = scmp.ne.s32.totalorder %s48, %s51
      %p57 = scmp.eq.s32.totalorder %s24, 0
      %p58 = por %p56, %p57
      %p59 = scmp.ne.s32.totalorder %s48, %s51
      %p60 = scmp.eq.s32.totalorder %s29, 1
      %p61 = por %p59, %p60
      %p62 = scmp.ne.s32.totalorder %s51, %s52
      %p63 = scmp.eq.s32.totalorder %s29, 0
      %p64 = por %p62, %p63
      %p65 = scmp.ne.s32.totalorder %s51, %s52
      %p66 = scmp.eq.s32.totalorder %s30, 1
      %p67 = por %p65, %p66
      %p69 = scmp.ne.s32.totalorder %s52, %s68
      %p70 = scmp.eq.s32.totalorder %s30, 0
      %p71 = por %p69, %p70
      %s72 = ssub.s32 %s31, %s43
      %s73 = ssub.s32 %s32, %s39
      %s74 = sor.u32 %s72, %s73
      %p75 = scmp.eq.s32.totalorder %s74, 0
      %s77 = sadd.s32 %s76, 1
      %s78 = scalar_select %p75, %s76, %s77
      %p81 = pneg %p75
      %p82 = scmp.eq.s32.totalorder %s24, 1
      %p83 = por %p81, %p82
      %p84 = scmp.ne.s32.totalorder %s76, %s79
      %p85 = scmp.eq.s32.totalorder %s24, 0
      %p86 = por %p84, %p85
      %p87 = scmp.ne.s32.totalorder %s76, %s79
      %p88 = scmp.eq.s32.totalorder %s29, 1
      %p89 = por %p87, %p88
      %p90 = scmp.ne.s32.totalorder %s79, %s80
      %p91 = scmp.eq.s32.totalorder %s29, 0
      %p92 = por %p90, %p91
      %p93 = scmp.ne.s32.totalorder %s79, %s80
      %p94 = scmp.eq.s32.totalorder %s30, 1
      %p95 = por %p93, %p94
      %p97 = scmp.ne.s32.totalorder %s80, %s96
      %p98 = scmp.eq.s32.totalorder %s30, 0
      %p99 = por %p97, %p98
      %s101 = sadd.s32 %s100, 1
      %p104 = scmp.eq.s32.totalorder %s24, 1
      %p105 = scmp.ne.s32.totalorder %s100, %s102
      %p106 = scmp.eq.s32.totalorder %s24, 0
      %p107 = por %p105, %p106
      %p108 = scmp.ne.s32.totalorder %s100, %s102
      %p109 = scmp.eq.s32.totalorder %s29, 1
      %p110 = por %p108, %p109
      %p111 = scmp.ne.s32.totalorder %s102, %s103
      %p112 = scmp.eq.s32.totalorder %s29, 0
      %p113 = por %p111, %p112
      %p114 = scmp.ne.s32.totalorder %s102, %s103
      %p115 = scmp.eq.s32.totalorder %s30, 1
      %p116 = por %p114, %p115
      %p118 = scmp.ne.s32.totalorder %s103, %s117
      %p119 = scmp.eq.s32.totalorder %s30, 0
      %p120 = por %p118, %p119
      %s122 = sadd.s32 %s121, 1
      %p125 = scmp.eq.s32.totalorder %s24, 1
      %p126 = scmp.ne.s32.totalorder %s121, %s123
      %p127 = scmp.eq.s32.totalorder %s24, 0
      %p128 = por %p126, %p127
      %p129 = scmp.ne.s32.totalorder %s121, %s123
      %p130 = scmp.eq.s32.totalorder %s29, 1
      %p131 = por %p129, %p130
      %p132 = scmp.ne.s32.totalorder %s123, %s124
      %p133 = scmp.eq.s32.totalorder %s29, 0
      %p134 = por %p132, %p133
      %p135 = scmp.ne.s32.totalorder %s123, %s124
      %p136 = scmp.eq.s32.totalorder %s30, 1
      %p137 = por %p135, %p136
      %p139 = scmp.ne.s32.totalorder %s124, %s138
      %p140 = scmp.eq.s32.totalorder %s30, 0
      %p141 = por %p139, %p140
      %s142 = ssub.s32 %s31, %s43
      %p143 = scmp.eq.s32.totalorder %s142, 0
      %s145 = sadd.s32 %s144, 1
      %s146 = scalar_select %p143, %s144, %s145
      %p149 = pneg %p143
      %p150 = scmp.eq.s32.totalorder %s24, 1
      %p151 = por %p149, %p150
      %p152 = scmp.ne.s32.totalorder %s144, %s147
      %p153 = scmp.eq.s32.totalorder %s24, 0
      %p154 = por %p152, %p153
      %p155 = scmp.ne.s32.totalorder %s144, %s147
      %p156 = scmp.eq.s32.totalorder %s29, 1
      %p157 = por %p155, %p156
      %p158 = scmp.ne.s32.totalorder %s147, %s148
      %p159 = scmp.eq.s32.totalorder %s29, 0
      %p160 = por %p158, %p159
      %p161 = scmp.ne.s32.totalorder %s147, %s148
      %p162 = scmp.eq.s32.totalorder %s30, 1
      %p163 = por %p161, %p162
      %p165 = scmp.ne.s32.totalorder %s148, %s164
      %p166 = scmp.eq.s32.totalorder %s30, 0
      %p167 = por %p165, %p166
      %s168 = ssub.s32 %s31, %s43
      %p169 = scmp.eq.s32.totalorder %s168, 0
      %s171 = sadd.s32 %s170, 1
      %s172 = scalar_select %p169, %s170, %s171
      %p175 = pneg %p169
      %p176 = scmp.eq.s32.totalorder %s24, 1
      %p177 = por %p175, %p176
      %p178 = scmp.ne.s32.totalorder %s170, %s173
      %p179 = scmp.eq.s32.totalorder %s24, 0
      %p180 = por %p178, %p179
      %p181 = scmp.ne.s32.totalorder %s170, %s173
      %p182 = scmp.eq.s32.totalorder %s29, 1
      %p183 = por %p181, %p182
      %p184 = scmp.ne.s32.totalorder %s173, %s174
      %p185 = scmp.eq.s32.totalorder %s29, 0
      %p186 = por %p184, %p185
      %p187 = scmp.ne.s32.totalorder %s173, %s174
      %p188 = scmp.eq.s32.totalorder %s30, 1
      %p189 = por %p187, %p188
      %p191 = scmp.ne.s32.totalorder %s174, %s190
      %p192 = scmp.eq.s32.totalorder %s30, 0
      %p193 = por %p191, %p192
      %p194 = scmp.le.s32.totalorder 1, %s24
      %p195 = scmp.lt.s32.totalorder %s24, 3
      %p196 = pnand %p194, %p195
      %p197 = pneg %p196
      // Predicated region
      $region9: #{tpu_custom_call.1} parent=5 // pred_check
        _
      $region10: #{tpu_custom_call.1} parent=5 // pred_check_branch
        %199 = sbr.rel (%p196) target = $region12
      $region11: #{tpu_custom_call.1} parent=5 // pred_region
        %s200 = ssub.s32 %s24, 1
        // Predicated region
        $region13: #{tpu_custom_call.1} parent=11 // pred_check
          %p201 = pneg %p113
        $region14: #{tpu_custom_call.1} parent=11 // pred_check_branch
          %203 = sbr.rel (%p201) target = $region16
        $region15: #{tpu_custom_call.1} parent=11 // pred_region
          _
        $region16: #{tpu_custom_call.1} parent=11 // pred_fallthru
          _
        // Predicated region
        $region17: #{tpu_custom_call.1} parent=11 // pred_check
          %p204 = pneg %p134
        $region18: #{tpu_custom_call.1} parent=11 // pred_check_branch
          %206 = sbr.rel (%p204) target = $region20
        $region19: #{tpu_custom_call.1} parent=11 // pred_region
          _
        $region20: #{tpu_custom_call.1} parent=11 // pred_fallthru
          _
      $region12: #{tpu_custom_call.1} parent=5 // pred_fallthru
        _
      %p207 = scmp.lt.s32.totalorder %s24, 2
      // Predicated region
      $region21: #{tpu_custom_call.1} parent=5 // pred_check
        %p208 = pneg %p207
      $region22: #{tpu_custom_call.1} parent=5 // pred_check_branch
        %210 = sbr.rel (%p208) target = $region24
      $region23: #{tpu_custom_call.1} parent=5 // pred_region
        // Predicated region
        $region25: #{tpu_custom_call.1} parent=23 // pred_check
          %p211 = pneg %p58
        $region26: #{tpu_custom_call.1} parent=23 // pred_check_branch
          %213 = sbr.rel (%p211) target = $region28
        $region27: #{tpu_custom_call.1} parent=23 // pred_region
          %s214 = sand.u32 %s48, 1
          %s215 = scalar_lea.sflag [#allocation5], %s214
          %s216 = sand.u32 %s48, 1
          %s217 = smul.addr %s216, 8
          %s218 = scalar_lea.vmem [#allocation4], %s217
          %s220 = ssub.s32 128, 128
          %221 = vsyncadd %s215, %s220
          %s222 = smul.addr %s31, 4
          %s223 = sadd.s32 %s32, %s222
          %s224 = smul.addr %s223, 32
          %s225 = scalar_lea.hbm %s0, %s224
          %s226 = sshll.u32 %s218, 4
          %s227 = int_to_ptr.vmem [resolvable:$true] %s226
          %232 = dma.hbm_to_vmem [thread:$0]  %s225, 128, %s227, %s215, 32, 32, 2
        $region28: #{tpu_custom_call.1} parent=23 // pred_fallthru
          _
        // Predicated region
        $region29: #{tpu_custom_call.1} parent=23 // pred_check
          %p233 = pneg %p86
        $region30: #{tpu_custom_call.1} parent=23 // pred_check_branch
          %235 = sbr.rel (%p233) target = $region32
        $region31: #{tpu_custom_call.1} parent=23 // pred_region
          %s236 = sand.u32 %s76, 1
          %s237 = scalar_lea.sflag [#allocation8], %s236
          %s238 = sand.u32 %s76, 1
          %s239 = smul.addr %s238, 2
          %s240 = scalar_lea.vmem [#allocation7], %s239
          %s242 = ssub.s32 32, 32
          %243 = vsyncadd %s237, %s242
          %s244 = sadd.s32 %s32, %s31
          %s245 = smul.addr %s244, 32
          %s246 = scalar_lea.hbm %s1, %s245
          %s248 = sshll.u32 %s240, 4
          %s249 = int_to_ptr.vmem [resolvable:$true] %s248
          %251 = dma.hbm_to_vmem [thread:$0]  %s246, 32, %s249, %s237
        $region32: #{tpu_custom_call.1} parent=23 // pred_fallthru
          _
      $region24: #{tpu_custom_call.1} parent=5 // pred_fallthru
        _
      %p252 = scmp.le.s32.totalorder 1, %s24
      %p253 = scmp.lt.s32.totalorder %s24, 3
      %p254 = pnand %p252, %p253
      %p255 = pneg %p254
      // Predicated region
      $region33: #{tpu_custom_call.1} parent=5 // pred_check
        _
      $region34: #{tpu_custom_call.1} parent=5 // pred_check_branch
        %257 = sbr.rel (%p254) target = $region36
      $region35: #{tpu_custom_call.1} parent=5 // pred_region
        %s258 = ssub.s32 %s24, 1
        %s259 = sand.u32 %s51, 1
        %s260 = scalar_lea.sflag [#allocation5], %s259
        %s261 = sand.u32 %s51, 1
        %s262 = smul.addr %s261, 8
        %s263 = scalar_lea.vmem [#allocation4], %s262
        // Predicated region
        $region37: #{tpu_custom_call.1} parent=35 // pred_check
          %p264 = pneg %p64
        $region38: #{tpu_custom_call.1} parent=35 // pred_check_branch
          %266 = sbr.rel (%p264) target = $region40
        $region39: #{tpu_custom_call.1} parent=35 // pred_region
          %267 = dma.done %s260, 128
        $region40: #{tpu_custom_call.1} parent=35 // pred_fallthru
          _
        %s268 = sand.u32 %s79, 1
        %s269 = scalar_lea.sflag [#allocation8], %s268
        %s270 = sand.u32 %s79, 1
        %s271 = smul.addr %s270, 2
        %s272 = scalar_lea.vmem [#allocation7], %s271
        // Predicated region
        $region41: #{tpu_custom_call.1} parent=35 // pred_check
          %p273 = pneg %p92
        $region42: #{tpu_custom_call.1} parent=35 // pred_check_branch
          %275 = sbr.rel (%p273) target = $region44
        $region43: #{tpu_custom_call.1} parent=35 // pred_region
          %276 = dma.done %s269, 32
        $region44: #{tpu_custom_call.1} parent=35 // pred_fallthru
          _
        %s277 = sand.u32 %s51, 1
        %s278 = scalar_lea.sflag [#allocation5], %s277
        %s279 = sand.u32 %s51, 1
        %s280 = smul.addr %s279, 8
        %s281 = scalar_lea.vmem [#allocation4], %s280
        %p282 = pneg %p64
        %p283 = pneg %p61
        %s284 = sand.u32 %s79, 1
        %s285 = scalar_lea.sflag [#allocation8], %s284
        %s286 = sand.u32 %s79, 1
        %s287 = smul.addr %s286, 2
        %s288 = scalar_lea.vmem [#allocation7], %s287
        %p289 = pneg %p92
        %p290 = pneg %p89
        %p291 = pneg %p113
        %p292 = pneg %p110
        %p293 = pneg %p134
        %p294 = pneg %p131
        %p295 = pneg %p160
        %p296 = pneg %p157
        %s297 = sand.u32 %s147, 1
        %s298 = scalar_lea.sflag [#allocation6], %s297
        %s299 = sand.u32 %s147, 1
        %s300 = scalar_lea.vmem [#allocation9], %s299
        %p301 = pneg %p186
        %p302 = pneg %p183
        %s303 = sand.u32 %s173, 1
        %s304 = scalar_lea.sflag [#allocation11], %s303
        %s305 = sand.u32 %s173, 1
        %s306 = scalar_lea.vmem [#allocation10], %s305
        %p307 = scmp.eq.s32.totalorder %s34, 0
        // Predicated region
        $region45: #{tpu_custom_call.1} parent=35 // pred_check
          %p308 = pneg %p307
        $region46: #{tpu_custom_call.1} parent=35 // pred_check_branch
          %310 = sbr.rel (%p308) target = $region48
        $region47: #{tpu_custom_call.1} parent=35 // pred_region
          %311 = vst [vmem:[#allocation2] sm:$0x3] 0.0
          %312 = vst [vmem:[#allocation3] sm:$0x3] 0.0
        $region48: #{tpu_custom_call.1} parent=35 // pred_fallthru
          _
        %v313 = vld [vmem:[%s263] sm:$0x3]
        %v314 = vld [vmem:[%s263 + $0x2] sm:$0x3]
        %v315 = vld [vmem:[%s263 + $0x4] sm:$0x3]
        %v316 = vld [vmem:[%s263 + $0x6] sm:$0x3]
        %v317 = vld [vmem:[%s272] sm:$0x3]
        %vm318 = vcmask 1041408
        %v319 = vsel %vm318, %v313, -inf
        %v320 = vsel %vm318, %v314, -inf
        %v321 = vsel %vm318, %v315, -inf
        %v322 = vsel %vm318, %v316, -inf
        %v323 = vmax.f32 %v319, %v320
        %v324 = vmax.f32 %v321, %v322
        %v325 = vmax.f32 %v323, %v324
        %v326 = vsub.f32 %v313, %v325
        %v327 = vsub.f32 %v314, %v325
        %v328 = vsub.f32 %v315, %v325
        %v329 = vsub.f32 %v316, %v325
        %v330 = vmul.f32 %v326, 1.442695
        %v331 = vpow.pop %v330
        %v332 = vmul.f32 %v327, 1.442695
        %v333 = vpow.pop %v332
        %v334 = vmul.f32 %v328, 1.442695
        %v335 = vpow.pop %v334
        %v336 = vmul.f32 %v329, 1.442695
        %v337 = vpow.pop %v336
        %v338 = vsel %vm318, %v331, 0.0
        %v339 = vsel %vm318, %v333, 0.0
        %v340 = vadd.f32 %v338, %v339
        %v341 = vsel %vm318, %v335, 0.0
        %v342 = vadd.f32 %v340, %v341
        %v343 = vsel %vm318, %v337, 0.0
        %v344 = vadd.f32 %v342, %v343
        %v345 = vlog2.pop %v344
        %v346 = vmul.f32 %v345, 0.6931472
        %vm347 = vcmp.ne.s32.totalorder %v317, 4294967196
        %v348 = vsel %vm347, %v317, 0
        %v349 = vld [vmem:[%s3] sm:$0x1]
        %v350 = vld [vmem:[%s3 + $0x1] sm:$0x1]
        %v351 = vld [vmem:[%s3 + $0x2] sm:$0x1]
        %v352 = vld [vmem:[%s3 + $0x3] sm:$0x1]
        %v353 = vlaneseq
        %v354 = vshrl.u32 %v353, 7
        %v355 = vsub.s32 0, %v354
        %v356 = vrot.slane %v349, %v355
        %v357 = vlaneseq
        %v358 = vshrl.u32 %v357, 7
        %v359 = vsub.s32 0, %v358
        %v360 = vrot.slane %v350, %v359
        %v361 = vlaneseq
        %v362 = vshrl.u32 %v361, 7
        %v363 = vsub.s32 0, %v362
        %v364 = vrot.slane %v351, %v363
        %v365 = vlaneseq
        %v366 = vshrl.u32 %v365, 7
        %v367 = vsub.s32 0, %v366
        %v368 = vrot.slane %v352, %v367
        %vm369 = vcmp.eq.s32.totalorder %v356, %v348
        %vm370 = vcmp.eq.s32.totalorder %v360, %v348
        %vm371 = vcmp.eq.s32.totalorder %v364, %v348
        %vm372 = vcmp.eq.s32.totalorder %v368, %v348
        %v373 = vsel %vm369, %v326, 0.0
        %v374 = vsel %vm370, %v327, 0.0
        %v375 = vsel %vm371, %v328, 0.0
        %v376 = vsel %vm372, %v329, 0.0
        %v377 = vsel %vm318, %v373, 0.0
        %v378 = vsel %vm318, %v374, 0.0
        %v379 = vadd.f32 %v377, %v378
        %v380 = vsel %vm318, %v375, 0.0
        %v381 = vadd.f32 %v379, %v380
        %v382 = vsel %vm318, %v376, 0.0
        %v383 = vadd.f32 %v381, %v382
        %v384 = vsub.f32 %v383, %v346
        %v385 = vld [vmem:[%s2] sm:$0x1]
        %v386 = vld [vmem:[%s2 + $0x1] sm:$0x1]
        %v387 = vld [vmem:[%s2 + $0x2] sm:$0x1]
        %v388 = vld [vmem:[%s2 + $0x3] sm:$0x1]
        %v393 = vlaneseq
        %v394 = vshrl.u32 %v393, 7
        %v395 = vsub.s32 0, %v394
        %v396 = vrot.slane %v385, %v395
        %v397 = vlaneseq
        %v398 = vshrl.u32 %v397, 7
        %v399 = vsub.s32 0, %v398
        %v400 = vrot.slane %v386, %v399
        %v401 = vlaneseq
        %v402 = vshrl.u32 %v401, 7
        %v403 = vsub.s32 0, %v402
        %v404 = vrot.slane %v387, %v403
        %v405 = vlaneseq
        %v406 = vshrl.u32 %v405, 7
        %v407 = vsub.s32 0, %v406
        %v408 = vrot.slane %v388, %v407
        %v413 = vsel %vm369, %v396, 0.0
        %v414 = vsel %vm370, %v400, 0.0
        %v415 = vsel %vm371, %v404, 0.0
        %v416 = vsel %vm372, %v408, 0.0
        %v417 = vsel %vm318, %v413, 0.0
        %v418 = vsel %vm318, %v414, 0.0
        %v419 = vadd.f32 %v417, %v418
        %v420 = vsel %vm318, %v415, 0.0
        %v421 = vadd.f32 %v419, %v420
        %v422 = vsel %vm318, %v416, 0.0
        %v423 = vadd.f32 %v421, %v422
        %v424 = vsub.f32 0.0, %v423
        %v425 = vmul.f32 %v424, %v384
        %v426 = vmul.f32 %v384, 1.442695
        %v427 = vpow.pop %v426
        %v428 = vsub.f32 1.0, %v427
        %v429 = vmax.f32 %v428, 0.0
        %v430 = vmul.f32 %v429, %v429
        %v431 = vmul.f32 %v430, %v425
        %v432 = vld [vmem:[#allocation2] sm:$0x3]
        %v433 = vsel %vm347, %v431, 0.0
        %v434 = vadd.f32 %v432, %v433
        %435 = vst [vmem:[#allocation2] sm:$0x3] %v434
        %v436 = vld [vmem:[#allocation3] sm:$0x3]
        %v437 = vsel %vm347, 1.0, 0.0
        %v438 = vadd.f32 %v436, %v437
        %439 = vst [vmem:[#allocation3] sm:$0x3] %v438
        // Predicated region
        $region49: #{tpu_custom_call.1} parent=35 // pred_check
          %p440 = pneg %p307
        $region50: #{tpu_custom_call.1} parent=35 // pred_check_branch
          %442 = sbr.rel (%p440) target = $region52
        $region51: #{tpu_custom_call.1} parent=35 // pred_region
          %v443 = vld [vmem:[#allocation2] sm:$0x3]
          %v444 = vsel %vm318, %v443, 0.0
          %v445 = vrot.slane %v444, 4
          %v446 = vadd.f32 %v444, %v445
          %v447 = vrot.slane %v446, 2
          %v448 = vadd.f32 %v446, %v447
          %v449 = vrot.slane %v448, 1
          %v450 = vadd.f32 %v448, %v449
          %451 = vst [vmem:[%s300] sm:$0x1] %v450
          %v452 = vld [vmem:[#allocation3] sm:$0x3]
          %v453 = vsel %vm318, %v452, 0.0
          %v454 = vrot.slane %v453, 4
          %v455 = vadd.f32 %v453, %v454
          %v456 = vrot.slane %v455, 2
          %v457 = vadd.f32 %v455, %v456
          %v458 = vrot.slane %v457, 1
          %v459 = vadd.f32 %v457, %v458
          %460 = vst [vmem:[%s306] sm:$0x1] %v459
        $region52: #{tpu_custom_call.1} parent=35 // pred_fallthru
          _
        %s461 = sand.u32 %s147, 1
        %s462 = scalar_lea.sflag [#allocation6], %s461
        %s463 = sand.u32 %s147, 1
        %s464 = scalar_lea.vmem [#allocation9], %s463
        %s465 = sand.u32 %s173, 1
        %s466 = scalar_lea.sflag [#allocation11], %s465
        %s467 = sand.u32 %s173, 1
        %s468 = scalar_lea.vmem [#allocation10], %s467
        // Predicated region
        $region53: #{tpu_custom_call.1} parent=35 // pred_check
          %p469 = pneg %p157
        $region54: #{tpu_custom_call.1} parent=35 // pred_check_branch
          %471 = sbr.rel (%p469) target = $region56
        $region55: #{tpu_custom_call.1} parent=35 // pred_region
          %s473 = ssub.s32 16, 16
          %474 = vsyncadd %s462, %s473
          %s475 = smul.addr %s33, 16
          %s476 = scalar_lea.hbm %s4, %s475
          %s478 = sshll.u32 %s464, 4
          %s479 = int_to_ptr.vmem [resolvable:$true] %s478
          %481 = dma.vmem_to_hbm [thread:$0]  %s479, 16, %s476, %s462
        $region56: #{tpu_custom_call.1} parent=35 // pred_fallthru
          _
        // Predicated region
        $region57: #{tpu_custom_call.1} parent=35 // pred_check
          %p482 = pneg %p183
        $region58: #{tpu_custom_call.1} parent=35 // pred_check_branch
          %484 = sbr.rel (%p482) target = $region60
        $region59: #{tpu_custom_call.1} parent=35 // pred_region
          %s486 = ssub.s32 16, 16
          %487 = vsyncadd %s466, %s486
          %s488 = smul.addr %s33, 16
          %s489 = scalar_lea.hbm %s5, %s488
          %s491 = sshll.u32 %s468, 4
          %s492 = int_to_ptr.vmem [resolvable:$true] %s491
          %494 = dma.vmem_to_hbm [thread:$0]  %s492, 16, %s489, %s466
        $region60: #{tpu_custom_call.1} parent=35 // pred_fallthru
          _
      $region36: #{tpu_custom_call.1} parent=5 // pred_fallthru
        _
      %p495 = scmp.le.s32.totalorder 2, %s24
      // Predicated region
      $region61: #{tpu_custom_call.1} parent=5 // pred_check
        %p496 = pneg %p495
      $region62: #{tpu_custom_call.1} parent=5 // pred_check_branch
        %498 = sbr.rel (%p496) target = $region64
      $region63: #{tpu_custom_call.1} parent=5 // pred_region
        %s499 = ssub.s32 %s24, 2
        // Predicated region
        $region65: #{tpu_custom_call.1} parent=63 // pred_check
          %p500 = pneg %p163
        $region66: #{tpu_custom_call.1} parent=63 // pred_check_branch
          %502 = sbr.rel (%p500) target = $region68
        $region67: #{tpu_custom_call.1} parent=63 // pred_region
          %s503 = sand.u32 %s148, 1
          %s504 = scalar_lea.sflag [#allocation6], %s503
          %s505 = sand.u32 %s148, 1
          %s506 = scalar_lea.vmem [#allocation9], %s505
          %507 = dma.done %s504, 16
        $region68: #{tpu_custom_call.1} parent=63 // pred_fallthru
          _
        // Predicated region
        $region69: #{tpu_custom_call.1} parent=63 // pred_check
          %p508 = pneg %p189
        $region70: #{tpu_custom_call.1} parent=63 // pred_check_branch
          %510 = sbr.rel (%p508) target = $region72
        $region71: #{tpu_custom_call.1} parent=63 // pred_region
          %s511 = sand.u32 %s174, 1
          %s512 = scalar_lea.sflag [#allocation11], %s511
          %s513 = sand.u32 %s174, 1
          %s514 = scalar_lea.vmem [#allocation10], %s513
          %515 = dma.done %s512, 16
        $region72: #{tpu_custom_call.1} parent=63 // pred_fallthru
          _
      $region64: #{tpu_custom_call.1} parent=5 // pred_fallthru
        _
    $region6: #{tpu_custom_call.1} parent=1 // loop_footer
      %s28 = sadd.s32 1, %s24
    $region7: #{tpu_custom_call.1} parent=1 // loop_footer_branch
      %23 = sbr.rel target = $region3
    $region8: #{tpu_custom_call.1} parent=1 // loop_exit
      _
    %516 = vsyncpa [#allocation5], 1
    %s517 = scalar_lea.sflag [#allocation5], 1
    %518 = vsyncpa %s517, 1
    %519 = vsyncpa [#allocation8], 1
    %s520 = scalar_lea.sflag [#allocation8], 1
    %521 = vsyncpa %s520, 1
    %522 = vsyncpa [#allocation6], 1
    %s523 = scalar_lea.sflag [#allocation6], 1
    %524 = vsyncpa %s523, 1
    %525 = vsyncpa [#allocation11], 1
    %s526 = scalar_lea.sflag [#allocation11], 1
    %527 = vsyncpa %s526, 1

</llo_original>
